<compile_context>
chip_gen: v5e
topology: v5e:2x2
jax: 0.10.0
libtpu: 0.0.40
codegen_flags: <defaults>
</compile_context>

<pallas_src>
import functools

import jax
import jax.numpy as jnp
from jax import lax
from jax.experimental import pallas as pl
from jax.experimental.pallas import tpu as pltpu

_LANE = 128


def _round_up(x, m):
    return (x + m - 1) // m * m


def _rank_net_kernel(x_ref, w1_ref, b1_ref, w2_ref, b2_ref, w3t_ref, b3_ref, o_ref):
    """One row-tile of the 3-layer MLP.

    x_ref   : (tile, d_in)  input rows, natural width (no padding)
    w1_ref  : (d_in, h1_p)  matmul dtype (bf16/f32), out dim padded to 128-mult
    b1_ref  : (1, h1_p)     f32
    w2_ref  : (h1_p, h2_p)
    b2_ref  : (1, h2_p)
    w3t_ref : (8, h2_p)     transposed last-layer weight; row 0 real, rows 1..7 zero
    b3_ref  : (1, 1)        scalar last-layer bias (SMEM)
    o_ref   : (1, tile)     lane-dense scores for this tile (f32)
    """
    cdt = w1_ref.dtype  # matmul input dtype; accumulate + epilogue stay f32

    # Layer 1: Linear(d_in -> h1) + ReLU.
    h = jnp.dot(x_ref[...].astype(cdt), w1_ref[...],
                preferred_element_type=jnp.float32)
    h = jnp.maximum(h + b1_ref[...], 0.0)

    # Layer 2: Linear(h1 -> h2) + ReLU.
    h = jnp.dot(h.astype(cdt), w2_ref[...], preferred_element_type=jnp.float32)
    h = jnp.maximum(h + b2_ref[...], 0.0)

    # Layer 3: Linear(h2 -> 1) + ReLU, lane-packed.
    #   s[r, t] = sum_k w3t[r, k] * h[t, k]   -> (8, tile); only row 0 is real.
    # The tile's scores land along the lane axis, so the store below is a
    # lane-dense (1, tile) write instead of a 128x-padded (tile, 128) slab.
    s = lax.dot_general(w3t_ref[...], h.astype(cdt),
                        (((1,), (1,)), ((), ())),
                        preferred_element_type=jnp.float32)
    o_ref[...] = jnp.maximum(s[0:1, :] + b3_ref[0, 0], 0.0).astype(o_ref.dtype)


@functools.partial(jax.jit, static_argnames=("tile_m", "use_bf16"))
def rank_net_forward(x, w1, b1, w2, b2, w3, b3, *, tile_m=2048, use_bf16=True):
    """Forward pass of Rank_Net.  Returns scores of shape (N, 1), float32."""
    N, d_in = x.shape
    h1 = w1.shape[1]
    h2 = w2.shape[1]

    # Hidden dims padded to lane multiples (weights are tiny, one-time cost).
    h1_p = _round_up(h1, _LANE)
    h2_p = _round_up(h2, _LANE)

    # Row tile: large (default 2048) to amortize the ~0.35us per-step overhead,
    # capped at ~ceil(N/2) rounded to 512 so moderate batches still get >=2
    # grid steps (both v7x TensorCores engage).  Always a multiple of 512,
    # hence a multiple of 8 (x block rows) and 128 (lane-dense out block).
    half = -(-N // 2)
    tile = min(_round_up(max(tile_m, 1), 512), _round_up(half, 512))
    grid = (pl.cdiv(N, tile),)

    mm_dtype = jnp.bfloat16 if use_bf16 else jnp.float32

    # Weights/biases: cast + pad once (tiny).  x is passed untouched (no
    # jnp.pad / astype pass over x in HBM); it is cast per-tile in the kernel.
    w1p = jnp.pad(w1.astype(jnp.float32), ((0, 0), (0, h1_p - h1))).astype(mm_dtype)
    w2p = jnp.pad(w2.astype(jnp.float32),
                  ((0, h1_p - h1), (0, h2_p - h2))).astype(mm_dtype)
    # Transposed last layer: row 0 holds w3[:, 0], rows 1..7 are zero so the
    # trans_b matmul LHS is sublane-aligned (8, h2_p).
    w3t = jnp.zeros((8, h2_p), jnp.float32).at[0, :h2].set(
        w3.astype(jnp.float32)[:, 0]).astype(mm_dtype)
    b1p = jnp.pad(b1.astype(jnp.float32).reshape(1, -1), ((0, 0), (0, h1_p - h1)))
    b2p = jnp.pad(b2.astype(jnp.float32).reshape(1, -1), ((0, 0), (0, h2_p - h2)))
    b3s = b3.astype(jnp.float32).reshape(1, 1)

    res = lambda i: (0, 0)  # weights/biases resident across the whole grid

    out = pl.pallas_call(
        _rank_net_kernel,
        out_shape=jax.ShapeDtypeStruct((1, N), jnp.float32),
        grid=grid,
        in_specs=[
            pl.BlockSpec((tile, d_in), lambda i: (i, 0)),   # x tile (ragged last block OK)
            pl.BlockSpec((d_in, h1_p), res),                # W1
            pl.BlockSpec((1, h1_p), res),                   # b1
            pl.BlockSpec((h1_p, h2_p), res),                # W2
            pl.BlockSpec((1, h2_p), res),                   # b2
            pl.BlockSpec((8, h2_p), res),                   # W3^T (row 0 real)
            pl.BlockSpec(memory_space=pltpu.MemorySpace.SMEM),  # b3 scalar (1,1)
        ],
        out_specs=pl.BlockSpec((1, tile), lambda i: (0, i)),
        compiler_params=pltpu.CompilerParams(
            dimension_semantics=("parallel",),  # shard batch tiles across TCs (v7x)
        ),
    )(x, w1p, b1p, w2p, b2p, w3t, b3s)

    # (1, N) lane-dense scores -> (N, 1); rows beyond N were never written.
    return out.reshape(N, 1)


def _init_linear(key, fan_in, fan_out):
    """PyTorch-style nn.Linear init: U(-1/sqrt(fan_in), 1/sqrt(fan_in)).

    Returns W of shape (fan_in, fan_out) (transposed w.r.t. torch storage)
    and b of shape (1, fan_out).
    """
    kw, kb = jax.random.split(key)
    bound = 1.0 / jnp.sqrt(jnp.float32(fan_in))
    w = jax.random.uniform(kw, (fan_in, fan_out), jnp.float32, -bound, bound)
    b = jax.random.uniform(kb, (1, fan_out), jnp.float32, -bound, bound)
    return w, b


def _reference_forward(x, w1, b1, w2, b2, w3, b3):
    h = jnp.maximum(x @ w1 + b1, 0.0)
    h = jnp.maximum(h @ w2 + b2, 0.0)
    return jnp.maximum(h @ w3 + b3, 0.0)


if __name__ == "__main__":
    # Shapes consistent with the module: Rank_Net(d_in=32), num_neurons=[200,100]
    # -> dims [32, 200, 100, 1].
    d_in, h1, h2 = 32, 200, 100

    root = jax.random.PRNGKey(0)
    kx, k1, k2, k3, kx2 = jax.random.split(root, 5)

    w1, b1 = _init_linear(k1, d_in, h1)
    w2, b2 = _init_linear(k2, h1, h2)
    w3, b3 = _init_linear(k3, h2, 1)

    # --- Small batch (one query's documents): single grid step ---
    N_small = 16
    x = jax.random.normal(kx, (N_small, d_in), jnp.float32)
    ref = _reference_forward(x, w1, b1, w2, b2, w3, b3)

    out_f32 = jax.block_until_ready(
        rank_net_forward(x, w1, b1, w2, b2, w3, b3, use_bf16=False))
    assert out_f32.shape == (N_small, 1), out_f32.shape
    assert jnp.allclose(out_f32, ref, atol=1e-3, rtol=1e-3), "f32 small-batch mismatch"

    out_bf16 = jax.block_until_ready(rank_net_forward(x, w1, b1, w2, b2, w3, b3))
    assert out_bf16.shape == (N_small, 1), out_bf16.shape
    assert jnp.allclose(out_bf16, ref, atol=1e-1, rtol=1e-1), "bf16 small-batch mismatch"

    # --- Larger ragged batch: 2 grid steps (tile=512), partial last block ---
    N_big = 600
    xb = jax.random.normal(kx2, (N_big, d_in), jnp.float32)
    ref_big = _reference_forward(xb, w1, b1, w2, b2, w3, b3)

    out_big_f32 = jax.block_until_ready(
        rank_net_forward(xb, w1, b1, w2, b2, w3, b3, use_bf16=False))
    assert out_big_f32.shape == (N_big, 1), out_big_f32.shape
    assert jnp.allclose(out_big_f32, ref_big, atol=1e-3, rtol=1e-3), "f32 tiled mismatch"

    out_big_bf16 = jax.block_until_ready(
        rank_net_forward(xb, w1, b1, w2, b2, w3, b3))
    assert out_big_bf16.shape == (N_big, 1), out_big_bf16.shape
    assert jnp.allclose(out_big_bf16, ref_big, atol=1e-1, rtol=1e-1), "bf16 tiled mismatch"

    print("KERNEL_OK")
</pallas_src>

<mosaic_0001>
module attributes {stable_mosaic.version = 11 : i64} {
  func.func @_rank_net_kernel(%arg0: i32, %arg1: memref<512x32xf32, #tpu.memory_space<vmem>>, %arg2: memref<32x256xf32, #tpu.memory_space<vmem>>, %arg3: memref<1x256xf32, #tpu.memory_space<vmem>>, %arg4: memref<256x128xf32, #tpu.memory_space<vmem>>, %arg5: memref<1x128xf32, #tpu.memory_space<vmem>>, %arg6: memref<8x128xf32, #tpu.memory_space<vmem>>, %arg7: memref<1x1xf32, #tpu.memory_space<smem>>, %arg8: memref<1x512xf32, #tpu.memory_space<vmem>>) attributes {dimension_semantics = [#tpu.dimension_semantics<parallel>], iteration_bounds = array<i64: 1>, scalar_prefetch = 0 : i64, scratch_operands = 0 : i64, tpu.core_type = #tpu.core_type<tc>, window_params = [{transform_indices = @transform_0, window_bounds = array<i64: 512, 32>}, {pipeline_mode = #tpu.pipeline_mode<synchronous>, transform_indices = @transform_1, window_bounds = array<i64: 32, 256>}, {pipeline_mode = #tpu.pipeline_mode<synchronous>, transform_indices = @transform_2, window_bounds = array<i64: 1, 256>}, {pipeline_mode = #tpu.pipeline_mode<synchronous>, transform_indices = @transform_3, window_bounds = array<i64: 256, 128>}, {pipeline_mode = #tpu.pipeline_mode<synchronous>, transform_indices = @transform_4, window_bounds = array<i64: 1, 128>}, {pipeline_mode = #tpu.pipeline_mode<synchronous>, transform_indices = @transform_5, window_bounds = array<i64: 8, 128>}, {transform_indices = @transform_6, window_bounds = array<i64: 1, 1>}, {transform_indices = @transform_7, window_bounds = array<i64: 1, 512>}]} {
    %c0 = arith.constant 0 : index
    %c0_0 = arith.constant 0 : index
    %0 = vector.load %arg1[%c0, %c0_0] : memref<512x32xf32, #tpu.memory_space<vmem>>, vector<512x32xf32>
    %c0_1 = arith.constant 0 : index
    %c0_2 = arith.constant 0 : index
    %1 = vector.load %arg2[%c0_1, %c0_2] : memref<32x256xf32, #tpu.memory_space<vmem>>, vector<32x256xf32>
    %cst = arith.constant dense<0.000000e+00> : vector<512x256xf32>
    %2 = tpu.matmul %0, %1, %cst {dimension_numbers = #tpu.dot_dimension_numbers<[1], [0], [0], [1], [0, 0, 1, 1], [], []>} : vector<512x32xf32>, vector<32x256xf32>, vector<512x256xf32> -> vector<512x256xf32>
    %c0_3 = arith.constant 0 : index
    %c0_4 = arith.constant 0 : index
    %3 = vector.load %arg3[%c0_3, %c0_4] : memref<1x256xf32, #tpu.memory_space<vmem>>, vector<1x256xf32>
    %4 = vector.broadcast %3 : vector<1x256xf32> to vector<512x256xf32>
    %5 = arith.addf %2, %4 : vector<512x256xf32>
    %cst_5 = arith.constant 0.000000e+00 : f32
    %6 = vector.broadcast %cst_5 : f32 to vector<512x256xf32>
    %7 = arith.maximumf %5, %6 : vector<512x256xf32>
    %c0_6 = arith.constant 0 : index
    %c0_7 = arith.constant 0 : index
    %8 = vector.load %arg4[%c0_6, %c0_7] : memref<256x128xf32, #tpu.memory_space<vmem>>, vector<256x128xf32>
    %cst_8 = arith.constant dense<0.000000e+00> : vector<512x128xf32>
    %9 = tpu.matmul %7, %8, %cst_8 {dimension_numbers = #tpu.dot_dimension_numbers<[1], [0], [0], [1], [0, 0, 1, 1], [], []>} : vector<512x256xf32>, vector<256x128xf32>, vector<512x128xf32> -> vector<512x128xf32>
    %c0_9 = arith.constant 0 : index
    %c0_10 = arith.constant 0 : index
    %10 = vector.load %arg5[%c0_9, %c0_10] : memref<1x128xf32, #tpu.memory_space<vmem>>, vector<1x128xf32>
    %11 = vector.broadcast %10 : vector<1x128xf32> to vector<512x128xf32>
    %12 = arith.addf %9, %11 : vector<512x128xf32>
    %cst_11 = arith.constant 0.000000e+00 : f32
    %13 = vector.broadcast %cst_11 : f32 to vector<512x128xf32>
    %14 = arith.maximumf %12, %13 : vector<512x128xf32>
    %c0_12 = arith.constant 0 : index
    %c0_13 = arith.constant 0 : index
    %15 = vector.load %arg6[%c0_12, %c0_13] : memref<8x128xf32, #tpu.memory_space<vmem>>, vector<8x128xf32>
    %cst_14 = arith.constant dense<0.000000e+00> : vector<8x512xf32>
    %16 = tpu.matmul %15, %14, %cst_14 {dimension_numbers = #tpu.dot_dimension_numbers<[1], [1], [0], [0], [0, 0, 1, 0], [], []>} : vector<8x128xf32>, vector<512x128xf32>, vector<8x512xf32> -> vector<8x512xf32>
    %17 = vector.extract_strided_slice %16 {offsets = [0, 0], sizes = [1, 512], strides = [1, 1]} : vector<8x512xf32> to vector<1x512xf32>
    %c0_15 = arith.constant 0 : index
    %c0_16 = arith.constant 0 : index
    %18 = memref.load %arg7[%c0_15, %c0_16] : memref<1x1xf32, #tpu.memory_space<smem>>
    %19 = vector.broadcast %18 : f32 to vector<1x512xf32>
    %20 = arith.addf %17, %19 : vector<1x512xf32>
    %cst_17 = arith.constant 0.000000e+00 : f32
    %21 = vector.broadcast %cst_17 : f32 to vector<1x512xf32>
    %22 = arith.maximumf %20, %21 : vector<1x512xf32>
    %c0_18 = arith.constant 0 : index
    %c0_19 = arith.constant 0 : index
    %23 = vector.load %arg8[%c0_18, %c0_19] : memref<1x512xf32, #tpu.memory_space<vmem>>, vector<1x512xf32>
    tpu.vector_store %arg8[%c0_18, %c0_19], %22 {strides = array<i32>} : memref<1x512xf32, #tpu.memory_space<vmem>>, vector<1x512xf32>,
    return
  }
  func.func @transform_0(%arg0: i32) -> (i32, i32) {
    %c0_i32 = arith.constant 0 : i32
    %c0_i32_0 = arith.constant 0 : i32
    return %arg0, %c0_i32 : i32, i32
  }
  func.func @transform_1(%arg0: i32) -> (i32, i32) {
    %c0_i32 = arith.constant 0 : i32
    %c0_i32_0 = arith.constant 0 : i32
    %c0_i32_1 = arith.constant 0 : i32
    return %c0_i32, %c0_i32_0 : i32, i32
  }
  func.func @transform_2(%arg0: i32) -> (i32, i32) {
    %c0_i32 = arith.constant 0 : i32
    %c0_i32_0 = arith.constant 0 : i32
    %c0_i32_1 = arith.constant 0 : i32
    return %c0_i32, %c0_i32_0 : i32, i32
  }
  func.func @transform_3(%arg0: i32) -> (i32, i32) {
    %c0_i32 = arith.constant 0 : i32
    %c0_i32_0 = arith.constant 0 : i32
    %c0_i32_1 = arith.constant 0 : i32
    return %c0_i32, %c0_i32_0 : i32, i32
  }
  func.func @transform_4(%arg0: i32) -> (i32, i32) {
    %c0_i32 = arith.constant 0 : i32
    %c0_i32_0 = arith.constant 0 : i32
    %c0_i32_1 = arith.constant 0 : i32
    return %c0_i32, %c0_i32_0 : i32, i32
  }
  func.func @transform_5(%arg0: i32) -> (i32, i32) {
    %c0_i32 = arith.constant 0 : i32
    %c0_i32_0 = arith.constant 0 : i32
    %c0_i32_1 = arith.constant 0 : i32
    return %c0_i32, %c0_i32_0 : i32, i32
  }
  func.func @transform_6(%arg0: i32) -> (i32, i32) {
    %c0_i32 = arith.constant 0 : i32
    %c0_i32_0 = arith.constant 0 : i32
    %c0_i32_1 = arith.constant 0 : i32
    return %c0_i32, %c0_i32_0 : i32, i32
  }
  func.func @transform_7(%arg0: i32) -> (i32, i32) {
    %c0_i32 = arith.constant 0 : i32
    %c0_i32_0 = arith.constant 0 : i32
    return %c0_i32, %arg0 : i32, i32
  }
}

</mosaic_0001>

<llo_original>
// kernel: rank_net_forward.1
$region0: #{rank_net_forward.1}
  #allocation0 [shape = 'u32[]', space=smem, size = 0x4, offset = 0x4, fixed_abs, tag = 'smem constant byte address 0x4 - core index']
  #allocation1 [shape = 'u32[72,128]{1,0:T(1,128)}', space=vmem, size = 0x9000, scoped, tag = 'internal scratch']
  #allocation2 [shape = 'f32[1,1]{1,0:T(1,128)S(6)}', space=smem, size = 0x200, scoped, tag = 'scoped memory for rank_net_forward.1']
  %s0 = inlined_call_operand.vmem [shape: f32[16,32], index: 0, kind: input, shape index: {}]
  %s1 = inlined_call_operand.vmem [shape: f32[32,256], index: 1, kind: input, shape index: {}]
  %s2 = inlined_call_operand.vmem [shape: f32[1,256], index: 2, kind: input, shape index: {}]
  %s3 = inlined_call_operand.vmem [shape: f32[256,128], index: 3, kind: input, shape index: {}]
  %s4 = inlined_call_operand.vmem [shape: f32[1,128], index: 4, kind: input, shape index: {}]
  %s5 = inlined_call_operand.vmem [shape: f32[8,128], index: 5, kind: input, shape index: {}]
  %s6 = inlined_call_operand.<no memory space> [shape: f32[1,1], index: 6, kind: input, shape index: {}]
  %s7 = inlined_call_operand.hbm [shape: f32[1,16], index: 7, kind: output, shape index: {}]
  %s8 = sld [smem:[#allocation0]]
  $region38: #{rank_net_forward.1} parent=0
    _
  %s10 = ssub.s32 1, %s8
  %s11 = scalar_select 0, %s10, %s8
  %12 = sst [smem:[#allocation2]] %s6
  $region1: #{rank_net_forward.1} parent=0
    #allocation3 [shape = 'u8[2048]{0}', space=vmem, size = 0x800, scoped, tag = 'output window, operand 0, single buffered']
    #allocation4 [shape = 's32[1]{0}', space=sflag, size = 0x4, scoped, tag = 'scoped memory for rank_net_forward.1']
    %13 = vsyncpa [#allocation4], 0
    // Predicated region
    $region2: #{rank_net_forward.1} parent=1 // pred_check
      _
    $region3: #{rank_net_forward.1} parent=1 // pred_check_branch
      %15 = sbr.rel (0) target = $region5
    $region4: #{rank_net_forward.1} parent=1 // pred_region
      _
    $region5: #{rank_net_forward.1} parent=1 // pred_fallthru
      _
    // Predicated region
    $region6: #{rank_net_forward.1} parent=1 // pred_check
      _
    $region7: #{rank_net_forward.1} parent=1 // pred_check_branch
      %17 = sbr.rel (0) target = $region9
    $region8: #{rank_net_forward.1} parent=1 // pred_region
      _
    $region9: #{rank_net_forward.1} parent=1 // pred_fallthru
      _
    // Predicated region
    $region10: #{rank_net_forward.1} parent=1 // pred_check
      _
    $region11: #{rank_net_forward.1} parent=1 // pred_check_branch
      %19 = sbr.rel (0) target = $region13
    $region12: #{rank_net_forward.1} parent=1 // pred_region
      _
    $region13: #{rank_net_forward.1} parent=1 // pred_fallthru
      _
    // Predicated region
    $region14: #{rank_net_forward.1} parent=1 // pred_check
      _
    $region15: #{rank_net_forward.1} parent=1 // pred_check_branch
      %21 = sbr.rel (0) target = $region17
    $region16: #{rank_net_forward.1} parent=1 // pred_region
      _
    $region17: #{rank_net_forward.1} parent=1 // pred_fallthru
      _
    // Predicated region
    $region18: #{rank_net_forward.1} parent=1 // pred_check
      _
    $region19: #{rank_net_forward.1} parent=1 // pred_check_branch
      %23 = sbr.rel (0) target = $region21
    $region20: #{rank_net_forward.1} parent=1 // pred_region
      _
    $region21: #{rank_net_forward.1} parent=1 // pred_fallthru
      _
    // Predicated region
    $region22: #{rank_net_forward.1} parent=1 // pred_check
      _
    $region23: #{rank_net_forward.1} parent=1 // pred_check_branch
      %25 = sbr.rel (0) target = $region25
    $region24: #{rank_net_forward.1} parent=1 // pred_region
      _
    $region25: #{rank_net_forward.1} parent=1 // pred_fallthru
      _
    // Predicated region
    $region26: #{rank_net_forward.1} parent=1 // pred_check
      _
    $region27: #{rank_net_forward.1} parent=1 // pred_check_branch
      %27 = sbr.rel (0) target = $region29
    $region28: #{rank_net_forward.1} parent=1 // pred_region
      _
    $region29: #{rank_net_forward.1} parent=1 // pred_fallthru
      _
    %v28 = vld [vmem:[%s0] sm:$0xff]
    %v29 = vld [vmem:[%s0 + $0x8] sm:$0xff]
    %v30 = vld [vmem:[%s0 + $0x10] sm:$0xff]
    %v31 = vld [vmem:[%s0 + $0x18] sm:$0xff]
    %v32 = vld [vmem:[%s0 + $0x20] sm:$0xff]
    %v33 = vld [vmem:[%s0 + $0x28] sm:$0xff]
    %v34 = vld [vmem:[%s0 + $0x30] sm:$0xff]
    %v35 = vld [vmem:[%s0 + $0x38] sm:$0xff]
    %v36 = vld [vmem:[%s0 + $0x40] sm:$0xff]
    %v37 = vld [vmem:[%s0 + $0x48] sm:$0xff]
    %v38 = vld [vmem:[%s0 + $0x50] sm:$0xff]
    %v39 = vld [vmem:[%s0 + $0x58] sm:$0xff]
    %v40 = vld [vmem:[%s0 + $0x60] sm:$0xff]
    %v41 = vld [vmem:[%s0 + $0x68] sm:$0xff]
    %v42 = vld [vmem:[%s0 + $0x70] sm:$0xff]
    %v43 = vld [vmem:[%s0 + $0x78] sm:$0xff]
    %v44 = vld [vmem:[%s0 + $0x80] sm:$0xff]
    %v45 = vld [vmem:[%s0 + $0x88] sm:$0xff]
    %v46 = vld [vmem:[%s0 + $0x90] sm:$0xff]
    %v47 = vld [vmem:[%s0 + $0x98] sm:$0xff]
    %v48 = vld [vmem:[%s0 + $0xa0] sm:$0xff]
    %v49 = vld [vmem:[%s0 + $0xa8] sm:$0xff]
    %v50 = vld [vmem:[%s0 + $0xb0] sm:$0xff]
    %v51 = vld [vmem:[%s0 + $0xb8] sm:$0xff]
    %v52 = vld [vmem:[%s0 + $0xc0] sm:$0xff]
    %v53 = vld [vmem:[%s0 + $0xc8] sm:$0xff]
    %v54 = vld [vmem:[%s0 + $0xd0] sm:$0xff]
    %v55 = vld [vmem:[%s0 + $0xd8] sm:$0xff]
    %v56 = vld [vmem:[%s0 + $0xe0] sm:$0xff]
    %v57 = vld [vmem:[%s0 + $0xe8] sm:$0xff]
    %v58 = vld [vmem:[%s0 + $0xf0] sm:$0xff]
    %v59 = vld [vmem:[%s0 + $0xf8] sm:$0xff]
    %v60 = vld [vmem:[%s0 + $0x100] sm:$0xff]
    %v61 = vld [vmem:[%s0 + $0x108] sm:$0xff]
    %v62 = vld [vmem:[%s0 + $0x110] sm:$0xff]
    %v63 = vld [vmem:[%s0 + $0x118] sm:$0xff]
    %v64 = vld [vmem:[%s0 + $0x120] sm:$0xff]
    %v65 = vld [vmem:[%s0 + $0x128] sm:$0xff]
    %v66 = vld [vmem:[%s0 + $0x130] sm:$0xff]
    %v67 = vld [vmem:[%s0 + $0x138] sm:$0xff]
    %v68 = vld [vmem:[%s0 + $0x140] sm:$0xff]
    %v69 = vld [vmem:[%s0 + $0x148] sm:$0xff]
    %v70 = vld [vmem:[%s0 + $0x150] sm:$0xff]
    %v71 = vld [vmem:[%s0 + $0x158] sm:$0xff]
    %v72 = vld [vmem:[%s0 + $0x160] sm:$0xff]
    %v73 = vld [vmem:[%s0 + $0x168] sm:$0xff]
    %v74 = vld [vmem:[%s0 + $0x170] sm:$0xff]
    %v75 = vld [vmem:[%s0 + $0x178] sm:$0xff]
    %v76 = vld [vmem:[%s0 + $0x180] sm:$0xff]
    %v77 = vld [vmem:[%s0 + $0x188] sm:$0xff]
    %v78 = vld [vmem:[%s0 + $0x190] sm:$0xff]
    %v79 = vld [vmem:[%s0 + $0x198] sm:$0xff]
    %v80 = vld [vmem:[%s0 + $0x1a0] sm:$0xff]
    %v81 = vld [vmem:[%s0 + $0x1a8] sm:$0xff]
    %v82 = vld [vmem:[%s0 + $0x1b0] sm:$0xff]
    %v83 = vld [vmem:[%s0 + $0x1b8] sm:$0xff]
    %v84 = vld [vmem:[%s0 + $0x1c0] sm:$0xff]
    %v85 = vld [vmem:[%s0 + $0x1c8] sm:$0xff]
    %v86 = vld [vmem:[%s0 + $0x1d0] sm:$0xff]
    %v87 = vld [vmem:[%s0 + $0x1d8] sm:$0xff]
    %v88 = vld [vmem:[%s0 + $0x1e0] sm:$0xff]
    %v89 = vld [vmem:[%s0 + $0x1e8] sm:$0xff]
    %v90 = vld [vmem:[%s0 + $0x1f0] sm:$0xff]
    %v91 = vld [vmem:[%s0 + $0x1f8] sm:$0xff]
    %v92 = vld [vmem:[%s1] sm:$0xff]
    %v93 = vld [vmem:[%s1 + $0x8] sm:$0xff]
    %v94 = vld [vmem:[%s1 + $0x10] sm:$0xff]
    %v95 = vld [vmem:[%s1 + $0x18] sm:$0xff]
    %v96 = vld [vmem:[%s1 + $0x20] sm:$0xff]
    %v97 = vld [vmem:[%s1 + $0x28] sm:$0xff]
    %v98 = vld [vmem:[%s1 + $0x30] sm:$0xff]
    %v99 = vld [vmem:[%s1 + $0x38] sm:$0xff]
    %v100 = vld [vmem:[%s2] sm:$0x3]
    %v102 = vperm.slane %v100, 0
    %v103 = vperm.slane %v100, 1
    %vm106 = vcmask 261120
    %v108 = vsel %vm106, %v28, 0
    %v111 = vsel %vm106, %v29, 0
    %v114 = vsel %vm106, %v30, 0
    %v117 = vsel %vm106, %v31, 0
    %v120 = vsel %vm106, %v32, 0
    %v123 = vsel %vm106, %v33, 0
    %v126 = vsel %vm106, %v34, 0
    %v129 = vsel %vm106, %v35, 0
    %v132 = vsel %vm106, %v36, 0
    %v135 = vsel %vm106, %v37, 0
    %v138 = vsel %vm106, %v38, 0
    %v141 = vsel %vm106, %v39, 0
    %v144 = vsel %vm106, %v40, 0
    %v147 = vsel %vm106, %v41, 0
    %v150 = vsel %vm106, %v42, 0
    %v153 = vsel %vm106, %v43, 0
    %v156 = vsel %vm106, %v44, 0
    %v159 = vsel %vm106, %v45, 0
    %v162 = vsel %vm106, %v46, 0
    %v165 = vsel %vm106, %v47, 0
    %v168 = vsel %vm106, %v48, 0
    %v171 = vsel %vm106, %v49, 0
    %v174 = vsel %vm106, %v50, 0
    %v177 = vsel %vm106, %v51, 0
    %v180 = vsel %vm106, %v52, 0
    %v183 = vsel %vm106, %v53, 0
    %v186 = vsel %vm106, %v54, 0
    %v189 = vsel %vm106, %v55, 0
    %v192 = vsel %vm106, %v56, 0
    %v195 = vsel %vm106, %v57, 0
    %v198 = vsel %vm106, %v58, 0
    %v201 = vsel %vm106, %v59, 0
    %v204 = vsel %vm106, %v60, 0
    %v207 = vsel %vm106, %v61, 0
    %v210 = vsel %vm106, %v62, 0
    %v213 = vsel %vm106, %v63, 0
    %v216 = vsel %vm106, %v64, 0
    %v219 = vsel %vm106, %v65, 0
    %v222 = vsel %vm106, %v66, 0
    %v225 = vsel %vm106, %v67, 0
    %v228 = vsel %vm106, %v68, 0
    %v231 = vsel %vm106, %v69, 0
    %v234 = vsel %vm106, %v70, 0
    %v237 = vsel %vm106, %v71, 0
    %v240 = vsel %vm106, %v72, 0
    %v243 = vsel %vm106, %v73, 0
    %v246 = vsel %vm106, %v74, 0
    %v249 = vsel %vm106, %v75, 0
    %v252 = vsel %vm106, %v76, 0
    %v255 = vsel %vm106, %v77, 0
    %v258 = vsel %vm106, %v78, 0
    %v261 = vsel %vm106, %v79, 0
    %v264 = vsel %vm106, %v80, 0
    %v267 = vsel %vm106, %v81, 0
    %v270 = vsel %vm106, %v82, 0
    %v273 = vsel %vm106, %v83, 0
    %v276 = vsel %vm106, %v84, 0
    %v279 = vsel %vm106, %v85, 0
    %v282 = vsel %vm106, %v86, 0
    %v285 = vsel %vm106, %v87, 0
    %v288 = vsel %vm106, %v88, 0
    %v291 = vsel %vm106, %v89, 0
    %v294 = vsel %vm106, %v90, 0
    %v297 = vsel %vm106, %v91, 0
    %299 = vmatpush.msra.mxu0 0.0
    %300 = vmatpush.msra.mxu0 0.0
    %301 = vmatpush.msra.mxu0 0.0
    %302 = vmatpush.msra.mxu0 0.0
    %303 = vmatpush.msra.mxu0 0.0
    %304 = vmatpush.msra.mxu0 0.0
    %305 = vmatpush.msra.mxu0 0.0
    %306 = vmatpush.msra.mxu0 0.0
    %307 = vmatpush.msra.mxu0 0.0
    %308 = vmatpush.msra.mxu0 0.0
    %309 = vmatpush.msra.mxu0 0.0
    %310 = vmatpush.msra.mxu0 0.0
    %311 = vmatpush.msra.mxu0 %v98
    %312 = vmatpush.msra.mxu0 %v96
    %313 = vmatpush.msra.mxu0 %v94
    %314 = vmatpush.msra.mxu0 %v92
    %315 = vmatmul.f32.gmra.mxu0 %v108
    %v316 = vpop.f32.mrf.mxu0
    %v317 = vadd.f32 %v102, %v316
    %318 = vmatmul.f32.gmra.mxu0 %v111
    %v319 = vpop.f32.mrf.mxu0
    %v320 = vadd.f32 %v102, %v319
    %321 = vmatmul.f32.gmra.mxu0 %v114
    %v322 = vpop.f32.mrf.mxu0
    %v323 = vadd.f32 %v102, %v322
    %324 = vmatmul.f32.gmra.mxu0 %v117
    %v325 = vpop.f32.mrf.mxu0
    %v326 = vadd.f32 %v102, %v325
    %327 = vmatmul.f32.gmra.mxu0 %v120
    %v328 = vpop.f32.mrf.mxu0
    %v329 = vadd.f32 %v102, %v328
    %330 = vmatmul.f32.gmra.mxu0 %v123
    %v331 = vpop.f32.mrf.mxu0
    %v332 = vadd.f32 %v102, %v331
    %333 = vmatmul.f32.gmra.mxu0 %v126
    %v334 = vpop.f32.mrf.mxu0
    %v335 = vadd.f32 %v102, %v334
    %336 = vmatmul.f32.gmra.mxu0 %v129
    %v337 = vpop.f32.mrf.mxu0
    %v338 = vadd.f32 %v102, %v337
    %339 = vmatmul.f32.gmra.mxu0 %v132
    %v340 = vpop.f32.mrf.mxu0
    %v341 = vadd.f32 %v102, %v340
    %342 = vmatmul.f32.gmra.mxu0 %v135
    %v343 = vpop.f32.mrf.mxu0
    %v344 = vadd.f32 %v102, %v343
    %345 = vmatmul.f32.gmra.mxu0 %v138
    %v346 = vpop.f32.mrf.mxu0
    %v347 = vadd.f32 %v102, %v346
    %348 = vmatmul.f32.gmra.mxu0 %v141
    %v349 = vpop.f32.mrf.mxu0
    %v350 = vadd.f32 %v102, %v349
    %351 = vmatmul.f32.gmra.mxu0 %v144
    %v352 = vpop.f32.mrf.mxu0
    %v353 = vadd.f32 %v102, %v352
    %354 = vmatmul.f32.gmra.mxu0 %v147
    %v355 = vpop.f32.mrf.mxu0
    %v356 = vadd.f32 %v102, %v355
    %357 = vmatmul.f32.gmra.mxu0 %v150
    %v358 = vpop.f32.mrf.mxu0
    %v359 = vadd.f32 %v102, %v358
    %360 = vmatmul.f32.gmra.mxu0 %v153
    %v361 = vpop.f32.mrf.mxu0
    %v362 = vadd.f32 %v102, %v361
    %363 = vmatmul.f32.gmra.mxu0 %v156
    %v364 = vpop.f32.mrf.mxu0
    %v365 = vadd.f32 %v102, %v364
    %366 = vmatmul.f32.gmra.mxu0 %v159
    %v367 = vpop.f32.mrf.mxu0
    %v368 = vadd.f32 %v102, %v367
    %369 = vmatmul.f32.gmra.mxu0 %v162
    %v370 = vpop.f32.mrf.mxu0
    %v371 = vadd.f32 %v102, %v370
    %372 = vmatmul.f32.gmra.mxu0 %v165
    %v373 = vpop.f32.mrf.mxu0
    %v374 = vadd.f32 %v102, %v373
    %375 = vmatmul.f32.gmra.mxu0 %v168
    %v376 = vpop.f32.mrf.mxu0
    %v377 = vadd.f32 %v102, %v376
    %378 = vmatmul.f32.gmra.mxu0 %v171
    %v379 = vpop.f32.mrf.mxu0
    %v380 = vadd.f32 %v102, %v379
    %381 = vmatmul.f32.gmra.mxu0 %v174
    %v382 = vpop.f32.mrf.mxu0
    %v383 = vadd.f32 %v102, %v382
    %384 = vmatmul.f32.gmra.mxu0 %v177
    %v385 = vpop.f32.mrf.mxu0
    %v386 = vadd.f32 %v102, %v385
    %387 = vmatmul.f32.gmra.mxu0 %v180
    %v388 = vpop.f32.mrf.mxu0
    %v389 = vadd.f32 %v102, %v388
    %390 = vmatmul.f32.gmra.mxu0 %v183
    %v391 = vpop.f32.mrf.mxu0
    %v392 = vadd.f32 %v102, %v391
    %393 = vmatmul.f32.gmra.mxu0 %v186
    %v394 = vpop.f32.mrf.mxu0
    %v395 = vadd.f32 %v102, %v394
    %396 = vmatmul.f32.gmra.mxu0 %v189
    %v397 = vpop.f32.mrf.mxu0
    %v398 = vadd.f32 %v102, %v397
    %399 = vmatmul.f32.gmra.mxu0 %v192
    %v400 = vpop.f32.mrf.mxu0
    %v401 = vadd.f32 %v102, %v400
    %402 = vmatmul.f32.gmra.mxu0 %v195
    %v403 = vpop.f32.mrf.mxu0
    %v404 = vadd.f32 %v102, %v403
    %405 = vmatmul.f32.gmra.mxu0 %v198
    %v406 = vpop.f32.mrf.mxu0
    %v407 = vadd.f32 %v102, %v406
    %408 = vmatmul.f32.gmra.mxu0 %v201
    %v409 = vpop.f32.mrf.mxu0
    %v410 = vadd.f32 %v102, %v409
    %411 = vmatmul.f32.gmra.mxu0 %v204
    %v412 = vpop.f32.mrf.mxu0
    %v413 = vadd.f32 %v102, %v412
    %414 = vmatmul.f32.gmra.mxu0 %v207
    %v415 = vpop.f32.mrf.mxu0
    %v416 = vadd.f32 %v102, %v415
    %417 = vmatmul.f32.gmra.mxu0 %v210
    %v418 = vpop.f32.mrf.mxu0
    %v419 = vadd.f32 %v102, %v418
    %420 = vmatmul.f32.gmra.mxu0 %v213
    %v421 = vpop.f32.mrf.mxu0
    %v422 = vadd.f32 %v102, %v421
    %423 = vmatmul.f32.gmra.mxu0 %v216
    %v424 = vpop.f32.mrf.mxu0
    %v425 = vadd.f32 %v102, %v424
    %426 = vmatmul.f32.gmra.mxu0 %v219
    %v427 = vpop.f32.mrf.mxu0
    %v428 = vadd.f32 %v102, %v427
    %429 = vmatmul.f32.gmra.mxu0 %v222
    %v430 = vpop.f32.mrf.mxu0
    %v431 = vadd.f32 %v102, %v430
    %432 = vmatmul.f32.gmra.mxu0 %v225
    %v433 = vpop.f32.mrf.mxu0
    %v434 = vadd.f32 %v102, %v433
    %435 = vmatmul.f32.gmra.mxu0 %v228
    %v436 = vpop.f32.mrf.mxu0
    %v437 = vadd.f32 %v102, %v436
    %438 = vmatmul.f32.gmra.mxu0 %v231
    %v439 = vpop.f32.mrf.mxu0
    %v440 = vadd.f32 %v102, %v439
    %441 = vmatmul.f32.gmra.mxu0 %v234
    %v442 = vpop.f32.mrf.mxu0
    %v443 = vadd.f32 %v102, %v442
    %444 = vmatmul.f32.gmra.mxu0 %v237
    %v445 = vpop.f32.mrf.mxu0
    %v446 = vadd.f32 %v102, %v445
    %447 = vmatmul.f32.gmra.mxu0 %v240
    %v448 = vpop.f32.mrf.mxu0
    %v449 = vadd.f32 %v102, %v448
    %450 = vmatmul.f32.gmra.mxu0 %v243
    %v451 = vpop.f32.mrf.mxu0
    %v452 = vadd.f32 %v102, %v451
    %453 = vmatmul.f32.gmra.mxu0 %v246
    %v454 = vpop.f32.mrf.mxu0
    %v455 = vadd.f32 %v102, %v454
    %456 = vmatmul.f32.gmra.mxu0 %v249
    %v457 = vpop.f32.mrf.mxu0
    %v458 = vadd.f32 %v102, %v457
    %459 = vmatmul.f32.gmra.mxu0 %v252
    %v460 = vpop.f32.mrf.mxu0
    %v461 = vadd.f32 %v102, %v460
    %462 = vmatmul.f32.gmra.mxu0 %v255
    %v463 = vpop.f32.mrf.mxu0
    %v464 = vadd.f32 %v102, %v463
    %465 = vmatmul.f32.gmra.mxu0 %v258
    %v466 = vpop.f32.mrf.mxu0
    %v467 = vadd.f32 %v102, %v466
    %468 = vmatmul.f32.gmra.mxu0 %v261
    %v469 = vpop.f32.mrf.mxu0
    %v470 = vadd.f32 %v102, %v469
    %471 = vmatmul.f32.gmra.mxu0 %v264
    %v472 = vpop.f32.mrf.mxu0
    %v473 = vadd.f32 %v102, %v472
    %474 = vmatmul.f32.gmra.mxu0 %v267
    %v475 = vpop.f32.mrf.mxu0
    %v476 = vadd.f32 %v102, %v475
    %477 = vmatmul.f32.gmra.mxu0 %v270
    %v478 = vpop.f32.mrf.mxu0
    %v479 = vadd.f32 %v102, %v478
    %480 = vmatmul.f32.gmra.mxu0 %v273
    %v481 = vpop.f32.mrf.mxu0
    %v482 = vadd.f32 %v102, %v481
    %483 = vmatmul.f32.gmra.mxu0 %v276
    %v484 = vpop.f32.mrf.mxu0
    %v485 = vadd.f32 %v102, %v484
    %486 = vmatmul.f32.gmra.mxu0 %v279
    %v487 = vpop.f32.mrf.mxu0
    %v488 = vadd.f32 %v102, %v487
    %489 = vmatmul.f32.gmra.mxu0 %v282
    %v490 = vpop.f32.mrf.mxu0
    %v491 = vadd.f32 %v102, %v490
    %492 = vmatmul.f32.gmra.mxu0 %v285
    %v493 = vpop.f32.mrf.mxu0
    %v494 = vadd.f32 %v102, %v493
    %495 = vmatmul.f32.gmra.mxu0 %v288
    %v496 = vpop.f32.mrf.mxu0
    %v497 = vadd.f32 %v102, %v496
    %498 = vmatmul.f32.gmra.mxu0 %v291
    %v499 = vpop.f32.mrf.mxu0
    %v500 = vadd.f32 %v102, %v499
    %501 = vmatmul.f32.gmra.mxu0 %v294
    %v502 = vpop.f32.mrf.mxu0
    %v503 = vadd.f32 %v102, %v502
    %504 = vmatmul.f32.gmra.mxu0 %v297
    %v505 = vpop.f32.mrf.mxu0
    %v506 = vadd.f32 %v102, %v505
    %507 = vdwg.mxu0
    %508 = vmatpush.msra.mxu0 0.0
    %509 = vmatpush.msra.mxu0 0.0
    %510 = vmatpush.msra.mxu0 0.0
    %511 = vmatpush.msra.mxu0 0.0
    %512 = vmatpush.msra.mxu0 0.0
    %513 = vmatpush.msra.mxu0 0.0
    %514 = vmatpush.msra.mxu0 0.0
    %515 = vmatpush.msra.mxu0 0.0
    %516 = vmatpush.msra.mxu0 0.0
    %517 = vmatpush.msra.mxu0 0.0
    %518 = vmatpush.msra.mxu0 0.0
    %519 = vmatpush.msra.mxu0 0.0
    %520 = vmatpush.msra.mxu0 %v99
    %521 = vmatpush.msra.mxu0 %v97
    %522 = vmatpush.msra.mxu0 %v95
    %523 = vmatpush.msra.mxu0 %v93
    %524 = vmatmul.f32.gmra.mxu0 %v108
    %v525 = vpop.f32.mrf.mxu0
    %v526 = vadd.f32 %v103, %v525
    %527 = vmatmul.f32.gmra.mxu0 %v111
    %v528 = vpop.f32.mrf.mxu0
    %v529 = vadd.f32 %v103, %v528
    %530 = vmatmul.f32.gmra.mxu0 %v114
    %v531 = vpop.f32.mrf.mxu0
    %v532 = vadd.f32 %v103, %v531
    %533 = vmatmul.f32.gmra.mxu0 %v117
    %v534 = vpop.f32.mrf.mxu0
    %v535 = vadd.f32 %v103, %v534
    %536 = vmatmul.f32.gmra.mxu0 %v120
    %v537 = vpop.f32.mrf.mxu0
    %v538 = vadd.f32 %v103, %v537
    %539 = vmatmul.f32.gmra.mxu0 %v123
    %v540 = vpop.f32.mrf.mxu0
    %v541 = vadd.f32 %v103, %v540
    %542 = vmatmul.f32.gmra.mxu0 %v126
    %v543 = vpop.f32.mrf.mxu0
    %v544 = vadd.f32 %v103, %v543
    %545 = vmatmul.f32.gmra.mxu0 %v129
    %v546 = vpop.f32.mrf.mxu0
    %v547 = vadd.f32 %v103, %v546
    %548 = vmatmul.f32.gmra.mxu0 %v132
    %v549 = vpop.f32.mrf.mxu0
    %v550 = vadd.f32 %v103, %v549
    %551 = vmatmul.f32.gmra.mxu0 %v135
    %v552 = vpop.f32.mrf.mxu0
    %v553 = vadd.f32 %v103, %v552
    %554 = vmatmul.f32.gmra.mxu0 %v138
    %v555 = vpop.f32.mrf.mxu0
    %v556 = vadd.f32 %v103, %v555
    %557 = vmatmul.f32.gmra.mxu0 %v141
    %v558 = vpop.f32.mrf.mxu0
    %v559 = vadd.f32 %v103, %v558
    %560 = vmatmul.f32.gmra.mxu0 %v144
    %v561 = vpop.f32.mrf.mxu0
    %v562 = vadd.f32 %v103, %v561
    %563 = vmatmul.f32.gmra.mxu0 %v147
    %v564 = vpop.f32.mrf.mxu0
    %v565 = vadd.f32 %v103, %v564
    %566 = vmatmul.f32.gmra.mxu0 %v150
    %v567 = vpop.f32.mrf.mxu0
    %v568 = vadd.f32 %v103, %v567
    %569 = vmatmul.f32.gmra.mxu0 %v153
    %v570 = vpop.f32.mrf.mxu0
    %v571 = vadd.f32 %v103, %v570
    %572 = vmatmul.f32.gmra.mxu0 %v156
    %v573 = vpop.f32.mrf.mxu0
    %v574 = vadd.f32 %v103, %v573
    %575 = vmatmul.f32.gmra.mxu0 %v159
    %v576 = vpop.f32.mrf.mxu0
    %v577 = vadd.f32 %v103, %v576
    %578 = vmatmul.f32.gmra.mxu0 %v162
    %v579 = vpop.f32.mrf.mxu0
    %v580 = vadd.f32 %v103, %v579
    %581 = vmatmul.f32.gmra.mxu0 %v165
    %v582 = vpop.f32.mrf.mxu0
    %v583 = vadd.f32 %v103, %v582
    %584 = vmatmul.f32.gmra.mxu0 %v168
    %v585 = vpop.f32.mrf.mxu0
    %v586 = vadd.f32 %v103, %v585
    %587 = vmatmul.f32.gmra.mxu0 %v171
    %v588 = vpop.f32.mrf.mxu0
    %v589 = vadd.f32 %v103, %v588
    %590 = vmatmul.f32.gmra.mxu0 %v174
    %v591 = vpop.f32.mrf.mxu0
    %v592 = vadd.f32 %v103, %v591
    %593 = vmatmul.f32.gmra.mxu0 %v177
    %v594 = vpop.f32.mrf.mxu0
    %v595 = vadd.f32 %v103, %v594
    %596 = vmatmul.f32.gmra.mxu0 %v180
    %v597 = vpop.f32.mrf.mxu0
    %v598 = vadd.f32 %v103, %v597
    %599 = vmatmul.f32.gmra.mxu0 %v183
    %v600 = vpop.f32.mrf.mxu0
    %v601 = vadd.f32 %v103, %v600
    %602 = vmatmul.f32.gmra.mxu0 %v186
    %v603 = vpop.f32.mrf.mxu0
    %v604 = vadd.f32 %v103, %v603
    %605 = vmatmul.f32.gmra.mxu0 %v189
    %v606 = vpop.f32.mrf.mxu0
    %v607 = vadd.f32 %v103, %v606
    %608 = vmatmul.f32.gmra.mxu0 %v192
    %v609 = vpop.f32.mrf.mxu0
    %v610 = vadd.f32 %v103, %v609
    %611 = vmatmul.f32.gmra.mxu0 %v195
    %v612 = vpop.f32.mrf.mxu0
    %v613 = vadd.f32 %v103, %v612
    %614 = vmatmul.f32.gmra.mxu0 %v198
    %v615 = vpop.f32.mrf.mxu0
    %v616 = vadd.f32 %v103, %v615
    %617 = vmatmul.f32.gmra.mxu0 %v201
    %v618 = vpop.f32.mrf.mxu0
    %v619 = vadd.f32 %v103, %v618
    %620 = vmatmul.f32.gmra.mxu0 %v204
    %v621 = vpop.f32.mrf.mxu0
    %v622 = vadd.f32 %v103, %v621
    %623 = vmatmul.f32.gmra.mxu0 %v207
    %v624 = vpop.f32.mrf.mxu0
    %v625 = vadd.f32 %v103, %v624
    %626 = vmatmul.f32.gmra.mxu0 %v210
    %v627 = vpop.f32.mrf.mxu0
    %v628 = vadd.f32 %v103, %v627
    %629 = vmatmul.f32.gmra.mxu0 %v213
    %v630 = vpop.f32.mrf.mxu0
    %v631 = vadd.f32 %v103, %v630
    %632 = vmatmul.f32.gmra.mxu0 %v216
    %v633 = vpop.f32.mrf.mxu0
    %v634 = vadd.f32 %v103, %v633
    %635 = vmatmul.f32.gmra.mxu0 %v219
    %v636 = vpop.f32.mrf.mxu0
    %v637 = vadd.f32 %v103, %v636
    %638 = vmatmul.f32.gmra.mxu0 %v222
    %v639 = vpop.f32.mrf.mxu0
    %v640 = vadd.f32 %v103, %v639
    %641 = vmatmul.f32.gmra.mxu0 %v225
    %v642 = vpop.f32.mrf.mxu0
    %v643 = vadd.f32 %v103, %v642
    %644 = vmatmul.f32.gmra.mxu0 %v228
    %v645 = vpop.f32.mrf.mxu0
    %v646 = vadd.f32 %v103, %v645
    %647 = vmatmul.f32.gmra.mxu0 %v231
    %v648 = vpop.f32.mrf.mxu0
    %v649 = vadd.f32 %v103, %v648
    %650 = vmatmul.f32.gmra.mxu0 %v234
    %v651 = vpop.f32.mrf.mxu0
    %v652 = vadd.f32 %v103, %v651
    %653 = vmatmul.f32.gmra.mxu0 %v237
    %v654 = vpop.f32.mrf.mxu0
    %v655 = vadd.f32 %v103, %v654
    %656 = vmatmul.f32.gmra.mxu0 %v240
    %v657 = vpop.f32.mrf.mxu0
    %v658 = vadd.f32 %v103, %v657
    %659 = vmatmul.f32.gmra.mxu0 %v243
    %v660 = vpop.f32.mrf.mxu0
    %v661 = vadd.f32 %v103, %v660
    %662 = vmatmul.f32.gmra.mxu0 %v246
    %v663 = vpop.f32.mrf.mxu0
    %v664 = vadd.f32 %v103, %v663
    %665 = vmatmul.f32.gmra.mxu0 %v249
    %v666 = vpop.f32.mrf.mxu0
    %v667 = vadd.f32 %v103, %v666
    %668 = vmatmul.f32.gmra.mxu0 %v252
    %v669 = vpop.f32.mrf.mxu0
    %v670 = vadd.f32 %v103, %v669
    %671 = vmatmul.f32.gmra.mxu0 %v255
    %v672 = vpop.f32.mrf.mxu0
    %v673 = vadd.f32 %v103, %v672
    %674 = vmatmul.f32.gmra.mxu0 %v258
    %v675 = vpop.f32.mrf.mxu0
    %v676 = vadd.f32 %v103, %v675
    %677 = vmatmul.f32.gmra.mxu0 %v261
    %v678 = vpop.f32.mrf.mxu0
    %v679 = vadd.f32 %v103, %v678
    %680 = vmatmul.f32.gmra.mxu0 %v264
    %v681 = vpop.f32.mrf.mxu0
    %v682 = vadd.f32 %v103, %v681
    %683 = vmatmul.f32.gmra.mxu0 %v267
    %v684 = vpop.f32.mrf.mxu0
    %v685 = vadd.f32 %v103, %v684
    %686 = vmatmul.f32.gmra.mxu0 %v270
    %v687 = vpop.f32.mrf.mxu0
    %v688 = vadd.f32 %v103, %v687
    %689 = vmatmul.f32.gmra.mxu0 %v273
    %v690 = vpop.f32.mrf.mxu0
    %v691 = vadd.f32 %v103, %v690
    %692 = vmatmul.f32.gmra.mxu0 %v276
    %v693 = vpop.f32.mrf.mxu0
    %v694 = vadd.f32 %v103, %v693
    %695 = vmatmul.f32.gmra.mxu0 %v279
    %v696 = vpop.f32.mrf.mxu0
    %v697 = vadd.f32 %v103, %v696
    %698 = vmatmul.f32.gmra.mxu0 %v282
    %v699 = vpop.f32.mrf.mxu0
    %v700 = vadd.f32 %v103, %v699
    %701 = vmatmul.f32.gmra.mxu0 %v285
    %v702 = vpop.f32.mrf.mxu0
    %v703 = vadd.f32 %v103, %v702
    %704 = vmatmul.f32.gmra.mxu0 %v288
    %v705 = vpop.f32.mrf.mxu0
    %v706 = vadd.f32 %v103, %v705
    %707 = vmatmul.f32.gmra.mxu0 %v291
    %v708 = vpop.f32.mrf.mxu0
    %v709 = vadd.f32 %v103, %v708
    %710 = vmatmul.f32.gmra.mxu0 %v294
    %v711 = vpop.f32.mrf.mxu0
    %v712 = vadd.f32 %v103, %v711
    %713 = vmatmul.f32.gmra.mxu0 %v297
    %v714 = vpop.f32.mrf.mxu0
    %v715 = vadd.f32 %v103, %v714
    %716 = vdwg.mxu0
    %v717 = vmax.f32 %v317, 0.0
    %v718 = vmax.f32 %v526, 0.0
    %v719 = vmax.f32 %v320, 0.0
    %v720 = vmax.f32 %v529, 0.0
    %v721 = vmax.f32 %v323, 0.0
    %v722 = vmax.f32 %v532, 0.0
    %v723 = vmax.f32 %v326, 0.0
    %v724 = vmax.f32 %v535, 0.0
    %v725 = vmax.f32 %v329, 0.0
    %v726 = vmax.f32 %v538, 0.0
    %v727 = vmax.f32 %v332, 0.0
    %v728 = vmax.f32 %v541, 0.0
    %v729 = vmax.f32 %v335, 0.0
    %v730 = vmax.f32 %v544, 0.0
    %v731 = vmax.f32 %v338, 0.0
    %v732 = vmax.f32 %v547, 0.0
    %v733 = vmax.f32 %v341, 0.0
    %v734 = vmax.f32 %v550, 0.0
    %v735 = vmax.f32 %v344, 0.0
    %v736 = vmax.f32 %v553, 0.0
    %v737 = vmax.f32 %v347, 0.0
    %v738 = vmax.f32 %v556, 0.0
    %v739 = vmax.f32 %v350, 0.0
    %v740 = vmax.f32 %v559, 0.0
    %v741 = vmax.f32 %v353, 0.0
    %v742 = vmax.f32 %v562, 0.0
    %v743 = vmax.f32 %v356, 0.0
    %v744 = vmax.f32 %v565, 0.0
    %v745 = vmax.f32 %v359, 0.0
    %v746 = vmax.f32 %v568, 0.0
    %v747 = vmax.f32 %v362, 0.0
    %v748 = vmax.f32 %v571, 0.0
    %v749 = vmax.f32 %v365, 0.0
    %v750 = vmax.f32 %v574, 0.0
    %v751 = vmax.f32 %v368, 0.0
    %v752 = vmax.f32 %v577, 0.0
    %v753 = vmax.f32 %v371, 0.0
    %v754 = vmax.f32 %v580, 0.0
    %v755 = vmax.f32 %v374, 0.0
    %v756 = vmax.f32 %v583, 0.0
    %v757 = vmax.f32 %v377, 0.0
    %v758 = vmax.f32 %v586, 0.0
    %v759 = vmax.f32 %v380, 0.0
    %v760 = vmax.f32 %v589, 0.0
    %v761 = vmax.f32 %v383, 0.0
    %v762 = vmax.f32 %v592, 0.0
    %v763 = vmax.f32 %v386, 0.0
    %v764 = vmax.f32 %v595, 0.0
    %v765 = vmax.f32 %v389, 0.0
    %v766 = vmax.f32 %v598, 0.0
    %v767 = vmax.f32 %v392, 0.0
    %v768 = vmax.f32 %v601, 0.0
    %v769 = vmax.f32 %v395, 0.0
    %v770 = vmax.f32 %v604, 0.0
    %v771 = vmax.f32 %v398, 0.0
    %v772 = vmax.f32 %v607, 0.0
    %v773 = vmax.f32 %v401, 0.0
    %v774 = vmax.f32 %v610, 0.0
    %v775 = vmax.f32 %v404, 0.0
    %v776 = vmax.f32 %v613, 0.0
    %v777 = vmax.f32 %v407, 0.0
    %v778 = vmax.f32 %v616, 0.0
    %v779 = vmax.f32 %v410, 0.0
    %v780 = vmax.f32 %v619, 0.0
    %v781 = vmax.f32 %v413, 0.0
    %v782 = vmax.f32 %v622, 0.0
    %v783 = vmax.f32 %v416, 0.0
    %v784 = vmax.f32 %v625, 0.0
    %v785 = vmax.f32 %v419, 0.0
    %v786 = vmax.f32 %v628, 0.0
    %v787 = vmax.f32 %v422, 0.0
    %v788 = vmax.f32 %v631, 0.0
    %v789 = vmax.f32 %v425, 0.0
    %v790 = vmax.f32 %v634, 0.0
    %v791 = vmax.f32 %v428, 0.0
    %v792 = vmax.f32 %v637, 0.0
    %v793 = vmax.f32 %v431, 0.0
    %v794 = vmax.f32 %v640, 0.0
    %v795 = vmax.f32 %v434, 0.0
    %v796 = vmax.f32 %v643, 0.0
    %v797 = vmax.f32 %v437, 0.0
    %v798 = vmax.f32 %v646, 0.0
    %v799 = vmax.f32 %v440, 0.0
    %v800 = vmax.f32 %v649, 0.0
    %v801 = vmax.f32 %v443, 0.0
    %v802 = vmax.f32 %v652, 0.0
    %v803 = vmax.f32 %v446, 0.0
    %v804 = vmax.f32 %v655, 0.0
    %v805 = vmax.f32 %v449, 0.0
    %v806 = vmax.f32 %v658, 0.0
    %v807 = vmax.f32 %v452, 0.0
    %v808 = vmax.f32 %v661, 0.0
    %v809 = vmax.f32 %v455, 0.0
    %v810 = vmax.f32 %v664, 0.0
    %v811 = vmax.f32 %v458, 0.0
    %v812 = vmax.f32 %v667, 0.0
    %v813 = vmax.f32 %v461, 0.0
    %v814 = vmax.f32 %v670, 0.0
    %v815 = vmax.f32 %v464, 0.0
    %v816 = vmax.f32 %v673, 0.0
    %v817 = vmax.f32 %v467, 0.0
    %v818 = vmax.f32 %v676, 0.0
    %v819 = vmax.f32 %v470, 0.0
    %v820 = vmax.f32 %v679, 0.0
    %v821 = vmax.f32 %v473, 0.0
    %v822 = vmax.f32 %v682, 0.0
    %v823 = vmax.f32 %v476, 0.0
    %v824 = vmax.f32 %v685, 0.0
    %v825 = vmax.f32 %v479, 0.0
    %v826 = vmax.f32 %v688, 0.0
    %v827 = vmax.f32 %v482, 0.0
    %v828 = vmax.f32 %v691, 0.0
    %v829 = vmax.f32 %v485, 0.0
    %v830 = vmax.f32 %v694, 0.0
    %v831 = vmax.f32 %v488, 0.0
    %v832 = vmax.f32 %v697, 0.0
    %v833 = vmax.f32 %v491, 0.0
    %v834 = vmax.f32 %v700, 0.0
    %v835 = vmax.f32 %v494, 0.0
    %v836 = vmax.f32 %v703, 0.0
    %v837 = vmax.f32 %v497, 0.0
    %v838 = vmax.f32 %v706, 0.0
    %v839 = vmax.f32 %v500, 0.0
    %v840 = vmax.f32 %v709, 0.0
    %v841 = vmax.f32 %v503, 0.0
    %v842 = vmax.f32 %v712, 0.0
    %v843 = vmax.f32 %v506, 0.0
    %v844 = vmax.f32 %v715, 0.0
    %v845 = vld [vmem:[%s3] sm:$0xff]
    %v846 = vld [vmem:[%s3 + $0x8] sm:$0xff]
    %v847 = vld [vmem:[%s3 + $0x10] sm:$0xff]
    %v848 = vld [vmem:[%s3 + $0x18] sm:$0xff]
    %v849 = vld [vmem:[%s3 + $0x20] sm:$0xff]
    %v850 = vld [vmem:[%s3 + $0x28] sm:$0xff]
    %v851 = vld [vmem:[%s3 + $0x30] sm:$0xff]
    %v852 = vld [vmem:[%s3 + $0x38] sm:$0xff]
    %v853 = vld [vmem:[%s3 + $0x40] sm:$0xff]
    %v854 = vld [vmem:[%s3 + $0x48] sm:$0xff]
    %v855 = vld [vmem:[%s3 + $0x50] sm:$0xff]
    %v856 = vld [vmem:[%s3 + $0x58] sm:$0xff]
    %v857 = vld [vmem:[%s3 + $0x60] sm:$0xff]
    %v858 = vld [vmem:[%s3 + $0x68] sm:$0xff]
    %v859 = vld [vmem:[%s3 + $0x70] sm:$0xff]
    %v860 = vld [vmem:[%s3 + $0x78] sm:$0xff]
    %v861 = vld [vmem:[%s3 + $0x80] sm:$0xff]
    %v862 = vld [vmem:[%s3 + $0x88] sm:$0xff]
    %v863 = vld [vmem:[%s3 + $0x90] sm:$0xff]
    %v864 = vld [vmem:[%s3 + $0x98] sm:$0xff]
    %v865 = vld [vmem:[%s3 + $0xa0] sm:$0xff]
    %v866 = vld [vmem:[%s3 + $0xa8] sm:$0xff]
    %v867 = vld [vmem:[%s3 + $0xb0] sm:$0xff]
    %v868 = vld [vmem:[%s3 + $0xb8] sm:$0xff]
    %v869 = vld [vmem:[%s3 + $0xc0] sm:$0xff]
    %v870 = vld [vmem:[%s3 + $0xc8] sm:$0xff]
    %v871 = vld [vmem:[%s3 + $0xd0] sm:$0xff]
    %v872 = vld [vmem:[%s3 + $0xd8] sm:$0xff]
    %v873 = vld [vmem:[%s3 + $0xe0] sm:$0xff]
    %v874 = vld [vmem:[%s3 + $0xe8] sm:$0xff]
    %v875 = vld [vmem:[%s3 + $0xf0] sm:$0xff]
    %v876 = vld [vmem:[%s3 + $0xf8] sm:$0xff]
    %v877 = vld [vmem:[%s4] sm:$0x1]
    %v879 = vperm.slane %v877, 0
    %881 = vmatpush.msra.mxu0 %v860
    %882 = vmatpush.msra.mxu0 %v859
    %883 = vmatpush.msra.mxu0 %v858
    %884 = vmatpush.msra.mxu0 %v857
    %885 = vmatpush.msra.mxu0 %v856
    %886 = vmatpush.msra.mxu0 %v855
    %887 = vmatpush.msra.mxu0 %v854
    %888 = vmatpush.msra.mxu0 %v853
    %889 = vmatpush.msra.mxu0 %v852
    %890 = vmatpush.msra.mxu0 %v851
    %891 = vmatpush.msra.mxu0 %v850
    %892 = vmatpush.msra.mxu0 %v849
    %893 = vmatpush.msra.mxu0 %v848
    %894 = vmatpush.msra.mxu0 %v847
    %895 = vmatpush.msra.mxu0 %v846
    %896 = vmatpush.msra.mxu0 %v845
    %897 = vmatmul.f32.gmra.mxu0 %v717
    %v898 = vpop.f32.mrf.mxu0
    %v899 = vadd.f32 %v879, %v898
    %900 = vmatmul.f32.gmra.mxu0 %v719
    %v901 = vpop.f32.mrf.mxu0
    %v902 = vadd.f32 %v879, %v901
    %903 = vmatmul.f32.gmra.mxu0 %v721
    %v904 = vpop.f32.mrf.mxu0
    %v905 = vadd.f32 %v879, %v904
    %906 = vmatmul.f32.gmra.mxu0 %v723
    %v907 = vpop.f32.mrf.mxu0
    %v908 = vadd.f32 %v879, %v907
    %909 = vmatmul.f32.gmra.mxu0 %v725
    %v910 = vpop.f32.mrf.mxu0
    %v911 = vadd.f32 %v879, %v910
    %912 = vmatmul.f32.gmra.mxu0 %v727
    %v913 = vpop.f32.mrf.mxu0
    %v914 = vadd.f32 %v879, %v913
    %915 = vmatmul.f32.gmra.mxu0 %v729
    %v916 = vpop.f32.mrf.mxu0
    %v917 = vadd.f32 %v879, %v916
    %918 = vmatmul.f32.gmra.mxu0 %v731
    %v919 = vpop.f32.mrf.mxu0
    %v920 = vadd.f32 %v879, %v919
    %921 = vmatmul.f32.gmra.mxu0 %v733
    %v922 = vpop.f32.mrf.mxu0
    %v923 = vadd.f32 %v879, %v922
    %924 = vmatmul.f32.gmra.mxu0 %v735
    %v925 = vpop.f32.mrf.mxu0
    %v926 = vadd.f32 %v879, %v925
    %927 = vmatmul.f32.gmra.mxu0 %v737
    %v928 = vpop.f32.mrf.mxu0
    %v929 = vadd.f32 %v879, %v928
    %930 = vmatmul.f32.gmra.mxu0 %v739
    %v931 = vpop.f32.mrf.mxu0
    %v932 = vadd.f32 %v879, %v931
    %933 = vmatmul.f32.gmra.mxu0 %v741
    %v934 = vpop.f32.mrf.mxu0
    %v935 = vadd.f32 %v879, %v934
    %936 = vmatmul.f32.gmra.mxu0 %v743
    %v937 = vpop.f32.mrf.mxu0
    %v938 = vadd.f32 %v879, %v937
    %939 = vmatmul.f32.gmra.mxu0 %v745
    %v940 = vpop.f32.mrf.mxu0
    %v941 = vadd.f32 %v879, %v940
    %942 = vmatmul.f32.gmra.mxu0 %v747
    %v943 = vpop.f32.mrf.mxu0
    %v944 = vadd.f32 %v879, %v943
    %945 = vmatmul.f32.gmra.mxu0 %v749
    %v946 = vpop.f32.mrf.mxu0
    %v947 = vadd.f32 %v879, %v946
    %948 = vmatmul.f32.gmra.mxu0 %v751
    %v949 = vpop.f32.mrf.mxu0
    %v950 = vadd.f32 %v879, %v949
    %951 = vmatmul.f32.gmra.mxu0 %v753
    %v952 = vpop.f32.mrf.mxu0
    %v953 = vadd.f32 %v879, %v952
    %954 = vmatmul.f32.gmra.mxu0 %v755
    %v955 = vpop.f32.mrf.mxu0
    %v956 = vadd.f32 %v879, %v955
    %957 = vmatmul.f32.gmra.mxu0 %v757
    %v958 = vpop.f32.mrf.mxu0
    %v959 = vadd.f32 %v879, %v958
    %960 = vmatmul.f32.gmra.mxu0 %v759
    %v961 = vpop.f32.mrf.mxu0
    %v962 = vadd.f32 %v879, %v961
    %963 = vmatmul.f32.gmra.mxu0 %v761
    %v964 = vpop.f32.mrf.mxu0
    %v965 = vadd.f32 %v879, %v964
    %966 = vmatmul.f32.gmra.mxu0 %v763
    %v967 = vpop.f32.mrf.mxu0
    %v968 = vadd.f32 %v879, %v967
    %969 = vmatmul.f32.gmra.mxu0 %v765
    %v970 = vpop.f32.mrf.mxu0
    %v971 = vadd.f32 %v879, %v970
    %972 = vmatmul.f32.gmra.mxu0 %v767
    %v973 = vpop.f32.mrf.mxu0
    %v974 = vadd.f32 %v879, %v973
    %975 = vmatmul.f32.gmra.mxu0 %v769
    %v976 = vpop.f32.mrf.mxu0
    %v977 = vadd.f32 %v879, %v976
    %978 = vmatmul.f32.gmra.mxu0 %v771
    %v979 = vpop.f32.mrf.mxu0
    %v980 = vadd.f32 %v879, %v979
    %981 = vmatmul.f32.gmra.mxu0 %v773
    %v982 = vpop.f32.mrf.mxu0
    %v983 = vadd.f32 %v879, %v982
    %984 = vmatmul.f32.gmra.mxu0 %v775
    %v985 = vpop.f32.mrf.mxu0
    %v986 = vadd.f32 %v879, %v985
    %987 = vmatmul.f32.gmra.mxu0 %v777
    %v988 = vpop.f32.mrf.mxu0
    %v989 = vadd.f32 %v879, %v988
    %990 = vmatmul.f32.gmra.mxu0 %v779
    %v991 = vpop.f32.mrf.mxu0
    %v992 = vadd.f32 %v879, %v991
    %993 = vmatmul.f32.gmra.mxu0 %v781
    %v994 = vpop.f32.mrf.mxu0
    %v995 = vadd.f32 %v879, %v994
    %996 = vmatmul.f32.gmra.mxu0 %v783
    %v997 = vpop.f32.mrf.mxu0
    %v998 = vadd.f32 %v879, %v997
    %999 = vmatmul.f32.gmra.mxu0 %v785
    %v1000 = vpop.f32.mrf.mxu0
    %v1001 = vadd.f32 %v879, %v1000
    %1002 = vmatmul.f32.gmra.mxu0 %v787
    %v1003 = vpop.f32.mrf.mxu0
    %v1004 = vadd.f32 %v879, %v1003
    %1005 = vmatmul.f32.gmra.mxu0 %v789
    %v1006 = vpop.f32.mrf.mxu0
    %v1007 = vadd.f32 %v879, %v1006
    %1008 = vmatmul.f32.gmra.mxu0 %v791
    %v1009 = vpop.f32.mrf.mxu0
    %v1010 = vadd.f32 %v879, %v1009
    %1011 = vmatmul.f32.gmra.mxu0 %v793
    %v1012 = vpop.f32.mrf.mxu0
    %v1013 = vadd.f32 %v879, %v1012
    %1014 = vmatmul.f32.gmra.mxu0 %v795
    %v1015 = vpop.f32.mrf.mxu0
    %v1016 = vadd.f32 %v879, %v1015
    %1017 = vmatmul.f32.gmra.mxu0 %v797
    %v1018 = vpop.f32.mrf.mxu0
    %v1019 = vadd.f32 %v879, %v1018
    %1020 = vmatmul.f32.gmra.mxu0 %v799
    %v1021 = vpop.f32.mrf.mxu0
    %v1022 = vadd.f32 %v879, %v1021
    %1023 = vmatmul.f32.gmra.mxu0 %v801
    %v1024 = vpop.f32.mrf.mxu0
    %v1025 = vadd.f32 %v879, %v1024
    %1026 = vmatmul.f32.gmra.mxu0 %v803
    %v1027 = vpop.f32.mrf.mxu0
    %v1028 = vadd.f32 %v879, %v1027
    %1029 = vmatmul.f32.gmra.mxu0 %v805
    %v1030 = vpop.f32.mrf.mxu0
    %v1031 = vadd.f32 %v879, %v1030
    %1032 = vmatmul.f32.gmra.mxu0 %v807
    %v1033 = vpop.f32.mrf.mxu0
    %v1034 = vadd.f32 %v879, %v1033
    %1035 = vmatmul.f32.gmra.mxu0 %v809
    %v1036 = vpop.f32.mrf.mxu0
    %v1037 = vadd.f32 %v879, %v1036
    %1038 = vmatmul.f32.gmra.mxu0 %v811
    %v1039 = vpop.f32.mrf.mxu0
    %v1040 = vadd.f32 %v879, %v1039
    %1041 = vmatmul.f32.gmra.mxu0 %v813
    %v1042 = vpop.f32.mrf.mxu0
    %v1043 = vadd.f32 %v879, %v1042
    %1044 = vmatmul.f32.gmra.mxu0 %v815
    %v1045 = vpop.f32.mrf.mxu0
    %v1046 = vadd.f32 %v879, %v1045
    %1047 = vmatmul.f32.gmra.mxu0 %v817
    %v1048 = vpop.f32.mrf.mxu0
    %v1049 = vadd.f32 %v879, %v1048
    %1050 = vmatmul.f32.gmra.mxu0 %v819
    %v1051 = vpop.f32.mrf.mxu0
    %v1052 = vadd.f32 %v879, %v1051
    %1053 = vmatmul.f32.gmra.mxu0 %v821
    %v1054 = vpop.f32.mrf.mxu0
    %v1055 = vadd.f32 %v879, %v1054
    %1056 = vmatmul.f32.gmra.mxu0 %v823
    %v1057 = vpop.f32.mrf.mxu0
    %v1058 = vadd.f32 %v879, %v1057
    %1059 = vmatmul.f32.gmra.mxu0 %v825
    %v1060 = vpop.f32.mrf.mxu0
    %v1061 = vadd.f32 %v879, %v1060
    %1062 = vmatmul.f32.gmra.mxu0 %v827
    %v1063 = vpop.f32.mrf.mxu0
    %v1064 = vadd.f32 %v879, %v1063
    %1065 = vmatmul.f32.gmra.mxu0 %v829
    %v1066 = vpop.f32.mrf.mxu0
    %v1067 = vadd.f32 %v879, %v1066
    %1068 = vmatmul.f32.gmra.mxu0 %v831
    %v1069 = vpop.f32.mrf.mxu0
    %v1070 = vadd.f32 %v879, %v1069
    %1071 = vmatmul.f32.gmra.mxu0 %v833
    %v1072 = vpop.f32.mrf.mxu0
    %v1073 = vadd.f32 %v879, %v1072
    %1074 = vmatmul.f32.gmra.mxu0 %v835
    %v1075 = vpop.f32.mrf.mxu0
    %v1076 = vadd.f32 %v879, %v1075
    %1077 = vmatmul.f32.gmra.mxu0 %v837
    %v1078 = vpop.f32.mrf.mxu0
    %v1079 = vadd.f32 %v879, %v1078
    %1080 = vmatmul.f32.gmra.mxu0 %v839
    %v1081 = vpop.f32.mrf.mxu0
    %v1082 = vadd.f32 %v879, %v1081
    %1083 = vmatmul.f32.gmra.mxu0 %v841
    %v1084 = vpop.f32.mrf.mxu0
    %v1085 = vadd.f32 %v879, %v1084
    %1086 = vmatmul.f32.gmra.mxu0 %v843
    %v1087 = vpop.f32.mrf.mxu0
    %v1088 = vadd.f32 %v879, %v1087
    %1089 = vdwg.mxu0
    %1090 = vmatpush.msra.mxu0 %v876
    %1091 = vmatpush.msra.mxu0 %v875
    %1092 = vmatpush.msra.mxu0 %v874
    %1093 = vmatpush.msra.mxu0 %v873
    %1094 = vmatpush.msra.mxu0 %v872
    %1095 = vmatpush.msra.mxu0 %v871
    %1096 = vmatpush.msra.mxu0 %v870
    %1097 = vmatpush.msra.mxu0 %v869
    %1098 = vmatpush.msra.mxu0 %v868
    %1099 = vmatpush.msra.mxu0 %v867
    %1100 = vmatpush.msra.mxu0 %v866
    %1101 = vmatpush.msra.mxu0 %v865
    %1102 = vmatpush.msra.mxu0 %v864
    %1103 = vmatpush.msra.mxu0 %v863
    %1104 = vmatpush.msra.mxu0 %v862
    %1105 = vmatpush.msra.mxu0 %v861
    %1106 = vmatmul.f32.gmra.mxu0 %v718
    %v1107 = vpop.f32.mrf.mxu0
    %v1108 = vadd.f32 %v899, %v1107
    %1109 = vmatmul.f32.gmra.mxu0 %v720
    %v1110 = vpop.f32.mrf.mxu0
    %v1111 = vadd.f32 %v902, %v1110
    %1112 = vmatmul.f32.gmra.mxu0 %v722
    %v1113 = vpop.f32.mrf.mxu0
    %v1114 = vadd.f32 %v905, %v1113
    %1115 = vmatmul.f32.gmra.mxu0 %v724
    %v1116 = vpop.f32.mrf.mxu0
    %v1117 = vadd.f32 %v908, %v1116
    %1118 = vmatmul.f32.gmra.mxu0 %v726
    %v1119 = vpop.f32.mrf.mxu0
    %v1120 = vadd.f32 %v911, %v1119
    %1121 = vmatmul.f32.gmra.mxu0 %v728
    %v1122 = vpop.f32.mrf.mxu0
    %v1123 = vadd.f32 %v914, %v1122
    %1124 = vmatmul.f32.gmra.mxu0 %v730
    %v1125 = vpop.f32.mrf.mxu0
    %v1126 = vadd.f32 %v917, %v1125
    %1127 = vmatmul.f32.gmra.mxu0 %v732
    %v1128 = vpop.f32.mrf.mxu0
    %v1129 = vadd.f32 %v920, %v1128
    %1130 = vmatmul.f32.gmra.mxu0 %v734
    %v1131 = vpop.f32.mrf.mxu0
    %v1132 = vadd.f32 %v923, %v1131
    %1133 = vmatmul.f32.gmra.mxu0 %v736
    %v1134 = vpop.f32.mrf.mxu0
    %v1135 = vadd.f32 %v926, %v1134
    %1136 = vmatmul.f32.gmra.mxu0 %v738
    %v1137 = vpop.f32.mrf.mxu0
    %v1138 = vadd.f32 %v929, %v1137
    %1139 = vmatmul.f32.gmra.mxu0 %v740
    %v1140 = vpop.f32.mrf.mxu0
    %v1141 = vadd.f32 %v932, %v1140
    %1142 = vmatmul.f32.gmra.mxu0 %v742
    %v1143 = vpop.f32.mrf.mxu0
    %v1144 = vadd.f32 %v935, %v1143
    %1145 = vmatmul.f32.gmra.mxu0 %v744
    %v1146 = vpop.f32.mrf.mxu0
    %v1147 = vadd.f32 %v938, %v1146
    %1148 = vmatmul.f32.gmra.mxu0 %v746
    %v1149 = vpop.f32.mrf.mxu0
    %v1150 = vadd.f32 %v941, %v1149
    %1151 = vmatmul.f32.gmra.mxu0 %v748
    %v1152 = vpop.f32.mrf.mxu0
    %v1153 = vadd.f32 %v944, %v1152
    %1154 = vmatmul.f32.gmra.mxu0 %v750
    %v1155 = vpop.f32.mrf.mxu0
    %v1156 = vadd.f32 %v947, %v1155
    %1157 = vmatmul.f32.gmra.mxu0 %v752
    %v1158 = vpop.f32.mrf.mxu0
    %v1159 = vadd.f32 %v950, %v1158
    %1160 = vmatmul.f32.gmra.mxu0 %v754
    %v1161 = vpop.f32.mrf.mxu0
    %v1162 = vadd.f32 %v953, %v1161
    %1163 = vmatmul.f32.gmra.mxu0 %v756
    %v1164 = vpop.f32.mrf.mxu0
    %v1165 = vadd.f32 %v956, %v1164
    %1166 = vmatmul.f32.gmra.mxu0 %v758
    %v1167 = vpop.f32.mrf.mxu0
    %v1168 = vadd.f32 %v959, %v1167
    %1169 = vmatmul.f32.gmra.mxu0 %v760
    %v1170 = vpop.f32.mrf.mxu0
    %v1171 = vadd.f32 %v962, %v1170
    %1172 = vmatmul.f32.gmra.mxu0 %v762
    %v1173 = vpop.f32.mrf.mxu0
    %v1174 = vadd.f32 %v965, %v1173
    %1175 = vmatmul.f32.gmra.mxu0 %v764
    %v1176 = vpop.f32.mrf.mxu0
    %v1177 = vadd.f32 %v968, %v1176
    %1178 = vmatmul.f32.gmra.mxu0 %v766
    %v1179 = vpop.f32.mrf.mxu0
    %v1180 = vadd.f32 %v971, %v1179
    %1181 = vmatmul.f32.gmra.mxu0 %v768
    %v1182 = vpop.f32.mrf.mxu0
    %v1183 = vadd.f32 %v974, %v1182
    %1184 = vmatmul.f32.gmra.mxu0 %v770
    %v1185 = vpop.f32.mrf.mxu0
    %v1186 = vadd.f32 %v977, %v1185
    %1187 = vmatmul.f32.gmra.mxu0 %v772
    %v1188 = vpop.f32.mrf.mxu0
    %v1189 = vadd.f32 %v980, %v1188
    %1190 = vmatmul.f32.gmra.mxu0 %v774
    %v1191 = vpop.f32.mrf.mxu0
    %v1192 = vadd.f32 %v983, %v1191
    %1193 = vmatmul.f32.gmra.mxu0 %v776
    %v1194 = vpop.f32.mrf.mxu0
    %v1195 = vadd.f32 %v986, %v1194
    %1196 = vmatmul.f32.gmra.mxu0 %v778
    %v1197 = vpop.f32.mrf.mxu0
    %v1198 = vadd.f32 %v989, %v1197
    %1199 = vmatmul.f32.gmra.mxu0 %v780
    %v1200 = vpop.f32.mrf.mxu0
    %v1201 = vadd.f32 %v992, %v1200
    %1202 = vmatmul.f32.gmra.mxu0 %v782
    %v1203 = vpop.f32.mrf.mxu0
    %v1204 = vadd.f32 %v995, %v1203
    %1205 = vmatmul.f32.gmra.mxu0 %v784
    %v1206 = vpop.f32.mrf.mxu0
    %v1207 = vadd.f32 %v998, %v1206
    %1208 = vmatmul.f32.gmra.mxu0 %v786
    %v1209 = vpop.f32.mrf.mxu0
    %v1210 = vadd.f32 %v1001, %v1209
    %1211 = vmatmul.f32.gmra.mxu0 %v788
    %v1212 = vpop.f32.mrf.mxu0
    %v1213 = vadd.f32 %v1004, %v1212
    %1214 = vmatmul.f32.gmra.mxu0 %v790
    %v1215 = vpop.f32.mrf.mxu0
    %v1216 = vadd.f32 %v1007, %v1215
    %1217 = vmatmul.f32.gmra.mxu0 %v792
    %v1218 = vpop.f32.mrf.mxu0
    %v1219 = vadd.f32 %v1010, %v1218
    %1220 = vmatmul.f32.gmra.mxu0 %v794
    %v1221 = vpop.f32.mrf.mxu0
    %v1222 = vadd.f32 %v1013, %v1221
    %1223 = vmatmul.f32.gmra.mxu0 %v796
    %v1224 = vpop.f32.mrf.mxu0
    %v1225 = vadd.f32 %v1016, %v1224
    %1226 = vmatmul.f32.gmra.mxu0 %v798
    %v1227 = vpop.f32.mrf.mxu0
    %v1228 = vadd.f32 %v1019, %v1227
    %1229 = vmatmul.f32.gmra.mxu0 %v800
    %v1230 = vpop.f32.mrf.mxu0
    %v1231 = vadd.f32 %v1022, %v1230
    %1232 = vmatmul.f32.gmra.mxu0 %v802
    %v1233 = vpop.f32.mrf.mxu0
    %v1234 = vadd.f32 %v1025, %v1233
    %1235 = vmatmul.f32.gmra.mxu0 %v804
    %v1236 = vpop.f32.mrf.mxu0
    %v1237 = vadd.f32 %v1028, %v1236
    %1238 = vmatmul.f32.gmra.mxu0 %v806
    %v1239 = vpop.f32.mrf.mxu0
    %v1240 = vadd.f32 %v1031, %v1239
    %1241 = vmatmul.f32.gmra.mxu0 %v808
    %v1242 = vpop.f32.mrf.mxu0
    %v1243 = vadd.f32 %v1034, %v1242
    %1244 = vmatmul.f32.gmra.mxu0 %v810
    %v1245 = vpop.f32.mrf.mxu0
    %v1246 = vadd.f32 %v1037, %v1245
    %1247 = vmatmul.f32.gmra.mxu0 %v812
    %v1248 = vpop.f32.mrf.mxu0
    %v1249 = vadd.f32 %v1040, %v1248
    %1250 = vmatmul.f32.gmra.mxu0 %v814
    %v1251 = vpop.f32.mrf.mxu0
    %v1252 = vadd.f32 %v1043, %v1251
    %1253 = vmatmul.f32.gmra.mxu0 %v816
    %v1254 = vpop.f32.mrf.mxu0
    %v1255 = vadd.f32 %v1046, %v1254
    %1256 = vmatmul.f32.gmra.mxu0 %v818
    %v1257 = vpop.f32.mrf.mxu0
    %v1258 = vadd.f32 %v1049, %v1257
    %1259 = vmatmul.f32.gmra.mxu0 %v820
    %v1260 = vpop.f32.mrf.mxu0
    %v1261 = vadd.f32 %v1052, %v1260
    %1262 = vmatmul.f32.gmra.mxu0 %v822
    %v1263 = vpop.f32.mrf.mxu0
    %v1264 = vadd.f32 %v1055, %v1263
    %1265 = vmatmul.f32.gmra.mxu0 %v824
    %v1266 = vpop.f32.mrf.mxu0
    %v1267 = vadd.f32 %v1058, %v1266
    %1268 = vmatmul.f32.gmra.mxu0 %v826
    %v1269 = vpop.f32.mrf.mxu0
    %v1270 = vadd.f32 %v1061, %v1269
    %1271 = vmatmul.f32.gmra.mxu0 %v828
    %v1272 = vpop.f32.mrf.mxu0
    %v1273 = vadd.f32 %v1064, %v1272
    %1274 = vmatmul.f32.gmra.mxu0 %v830
    %v1275 = vpop.f32.mrf.mxu0
    %v1276 = vadd.f32 %v1067, %v1275
    %1277 = vmatmul.f32.gmra.mxu0 %v832
    %v1278 = vpop.f32.mrf.mxu0
    %v1279 = vadd.f32 %v1070, %v1278
    %1280 = vmatmul.f32.gmra.mxu0 %v834
    %v1281 = vpop.f32.mrf.mxu0
    %v1282 = vadd.f32 %v1073, %v1281
    %1283 = vmatmul.f32.gmra.mxu0 %v836
    %v1284 = vpop.f32.mrf.mxu0
    %v1285 = vadd.f32 %v1076, %v1284
    %1286 = vmatmul.f32.gmra.mxu0 %v838
    %v1287 = vpop.f32.mrf.mxu0
    %v1288 = vadd.f32 %v1079, %v1287
    %1289 = vmatmul.f32.gmra.mxu0 %v840
    %v1290 = vpop.f32.mrf.mxu0
    %v1291 = vadd.f32 %v1082, %v1290
    %1292 = vmatmul.f32.gmra.mxu0 %v842
    %v1293 = vpop.f32.mrf.mxu0
    %v1294 = vadd.f32 %v1085, %v1293
    %1295 = vmatmul.f32.gmra.mxu0 %v844
    %v1296 = vpop.f32.mrf.mxu0
    %v1297 = vadd.f32 %v1088, %v1296
    %1298 = vdwg.mxu0
    %v1299 = vmax.f32 %v1108, 0.0
    %v1300 = vmax.f32 %v1111, 0.0
    %v1301 = vmax.f32 %v1114, 0.0
    %v1302 = vmax.f32 %v1117, 0.0
    %v1303 = vmax.f32 %v1120, 0.0
    %v1304 = vmax.f32 %v1123, 0.0
    %v1305 = vmax.f32 %v1126, 0.0
    %v1306 = vmax.f32 %v1129, 0.0
    %v1307 = vmax.f32 %v1132, 0.0
    %v1308 = vmax.f32 %v1135, 0.0
    %v1309 = vmax.f32 %v1138, 0.0
    %v1310 = vmax.f32 %v1141, 0.0
    %v1311 = vmax.f32 %v1144, 0.0
    %v1312 = vmax.f32 %v1147, 0.0
    %v1313 = vmax.f32 %v1150, 0.0
    %v1314 = vmax.f32 %v1153, 0.0
    %v1315 = vmax.f32 %v1156, 0.0
    %v1316 = vmax.f32 %v1159, 0.0
    %v1317 = vmax.f32 %v1162, 0.0
    %v1318 = vmax.f32 %v1165, 0.0
    %v1319 = vmax.f32 %v1168, 0.0
    %v1320 = vmax.f32 %v1171, 0.0
    %v1321 = vmax.f32 %v1174, 0.0
    %v1322 = vmax.f32 %v1177, 0.0
    %v1323 = vmax.f32 %v1180, 0.0
    %v1324 = vmax.f32 %v1183, 0.0
    %v1325 = vmax.f32 %v1186, 0.0
    %v1326 = vmax.f32 %v1189, 0.0
    %v1327 = vmax.f32 %v1192, 0.0
    %v1328 = vmax.f32 %v1195, 0.0
    %v1329 = vmax.f32 %v1198, 0.0
    %v1330 = vmax.f32 %v1201, 0.0
    %v1331 = vmax.f32 %v1204, 0.0
    %v1332 = vmax.f32 %v1207, 0.0
    %v1333 = vmax.f32 %v1210, 0.0
    %v1334 = vmax.f32 %v1213, 0.0
    %v1335 = vmax.f32 %v1216, 0.0
    %v1336 = vmax.f32 %v1219, 0.0
    %v1337 = vmax.f32 %v1222, 0.0
    %v1338 = vmax.f32 %v1225, 0.0
    %v1339 = vmax.f32 %v1228, 0.0
    %v1340 = vmax.f32 %v1231, 0.0
    %v1341 = vmax.f32 %v1234, 0.0
    %v1342 = vmax.f32 %v1237, 0.0
    %v1343 = vmax.f32 %v1240, 0.0
    %v1344 = vmax.f32 %v1243, 0.0
    %v1345 = vmax.f32 %v1246, 0.0
    %v1346 = vmax.f32 %v1249, 0.0
    %v1347 = vmax.f32 %v1252, 0.0
    %v1348 = vmax.f32 %v1255, 0.0
    %v1349 = vmax.f32 %v1258, 0.0
    %v1350 = vmax.f32 %v1261, 0.0
    %v1351 = vmax.f32 %v1264, 0.0
    %v1352 = vmax.f32 %v1267, 0.0
    %v1353 = vmax.f32 %v1270, 0.0
    %v1354 = vmax.f32 %v1273, 0.0
    %v1355 = vmax.f32 %v1276, 0.0
    %v1356 = vmax.f32 %v1279, 0.0
    %v1357 = vmax.f32 %v1282, 0.0
    %v1358 = vmax.f32 %v1285, 0.0
    %v1359 = vmax.f32 %v1288, 0.0
    %v1360 = vmax.f32 %v1291, 0.0
    %v1361 = vmax.f32 %v1294, 0.0
    %v1362 = vmax.f32 %v1297, 0.0
    %v1363 = vld [vmem:[%s5] sm:$0xff]
    %1364 = vmatpush.xpose.msra.mxu0 %v1314
    %1365 = vmatpush.xpose.msra.mxu0 %v1313
    %1366 = vmatpush.xpose.msra.mxu0 %v1312
    %1367 = vmatpush.xpose.msra.mxu0 %v1311
    %1368 = vmatpush.xpose.msra.mxu0 %v1310
    %1369 = vmatpush.xpose.msra.mxu0 %v1309
    %1370 = vmatpush.xpose.msra.mxu0 %v1308
    %1371 = vmatpush.xpose.msra.mxu0 %v1307
    %1372 = vmatpush.xpose.msra.mxu0 %v1306
    %1373 = vmatpush.xpose.msra.mxu0 %v1305
    %1374 = vmatpush.xpose.msra.mxu0 %v1304
    %1375 = vmatpush.xpose.msra.mxu0 %v1303
    %1376 = vmatpush.xpose.msra.mxu0 %v1302
    %1377 = vmatpush.xpose.msra.mxu0 %v1301
    %1378 = vmatpush.xpose.msra.mxu0 %v1300
    %1379 = vmatpush.xpose.msra.mxu0 %v1299
    %1380 = vmatmul.f32.gmra.mxu0 %v1363
    %v1381 = vpop.f32.mrf.mxu0
    %v1382 = vadd.f32 0.0, %v1381
    %1383 = vdwg.mxu0
    %1384 = vmatpush.xpose.msra.mxu0 %v1330
    %1385 = vmatpush.xpose.msra.mxu0 %v1329
    %1386 = vmatpush.xpose.msra.mxu0 %v1328
    %1387 = vmatpush.xpose.msra.mxu0 %v1327
    %1388 = vmatpush.xpose.msra.mxu0 %v1326
    %1389 = vmatpush.xpose.msra.mxu0 %v1325
    %1390 = vmatpush.xpose.msra.mxu0 %v1324
    %1391 = vmatpush.xpose.msra.mxu0 %v1323
    %1392 = vmatpush.xpose.msra.mxu0 %v1322
    %1393 = vmatpush.xpose.msra.mxu0 %v1321
    %1394 = vmatpush.xpose.msra.mxu0 %v1320
    %1395 = vmatpush.xpose.msra.mxu0 %v1319
    %1396 = vmatpush.xpose.msra.mxu0 %v1318
    %1397 = vmatpush.xpose.msra.mxu0 %v1317
    %1398 = vmatpush.xpose.msra.mxu0 %v1316
    %1399 = vmatpush.xpose.msra.mxu0 %v1315
    %1400 = vmatmul.f32.gmra.mxu0 %v1363
    %v1401 = vpop.f32.mrf.mxu0
    %v1402 = vadd.f32 0.0, %v1401
    %1403 = vdwg.mxu0
    %1404 = vmatpush.xpose.msra.mxu0 %v1346
    %1405 = vmatpush.xpose.msra.mxu0 %v1345
    %1406 = vmatpush.xpose.msra.mxu0 %v1344
    %1407 = vmatpush.xpose.msra.mxu0 %v1343
    %1408 = vmatpush.xpose.msra.mxu0 %v1342
    %1409 = vmatpush.xpose.msra.mxu0 %v1341
    %1410 = vmatpush.xpose.msra.mxu0 %v1340
    %1411 = vmatpush.xpose.msra.mxu0 %v1339
    %1412 = vmatpush.xpose.msra.mxu0 %v1338
    %1413 = vmatpush.xpose.msra.mxu0 %v1337
    %1414 = vmatpush.xpose.msra.mxu0 %v1336
    %1415 = vmatpush.xpose.msra.mxu0 %v1335
    %1416 = vmatpush.xpose.msra.mxu0 %v1334
    %1417 = vmatpush.xpose.msra.mxu0 %v1333
    %1418 = vmatpush.xpose.msra.mxu0 %v1332
    %1419 = vmatpush.xpose.msra.mxu0 %v1331
    %1420 = vmatmul.f32.gmra.mxu0 %v1363
    %v1421 = vpop.f32.mrf.mxu0
    %v1422 = vadd.f32 0.0, %v1421
    %1423 = vdwg.mxu0
    %1424 = vmatpush.xpose.msra.mxu0 %v1362
    %1425 = vmatpush.xpose.msra.mxu0 %v1361
    %1426 = vmatpush.xpose.msra.mxu0 %v1360
    %1427 = vmatpush.xpose.msra.mxu0 %v1359
    %1428 = vmatpush.xpose.msra.mxu0 %v1358
    %1429 = vmatpush.xpose.msra.mxu0 %v1357
    %1430 = vmatpush.xpose.msra.mxu0 %v1356
    %1431 = vmatpush.xpose.msra.mxu0 %v1355
    %1432 = vmatpush.xpose.msra.mxu0 %v1354
    %1433 = vmatpush.xpose.msra.mxu0 %v1353
    %1434 = vmatpush.xpose.msra.mxu0 %v1352
    %1435 = vmatpush.xpose.msra.mxu0 %v1351
    %1436 = vmatpush.xpose.msra.mxu0 %v1350
    %1437 = vmatpush.xpose.msra.mxu0 %v1349
    %1438 = vmatpush.xpose.msra.mxu0 %v1348
    %1439 = vmatpush.xpose.msra.mxu0 %v1347
    %1440 = vmatmul.f32.gmra.mxu0 %v1363
    %v1441 = vpop.f32.mrf.mxu0
    %v1442 = vadd.f32 0.0, %v1441
    %1443 = vdwg.mxu0
    %s1444 = sld [smem:[#allocation2]]
    %v1445 = vstv %s1444
    %v1446 = vadd.f32 %v1382, %v1445
    %v1447 = vadd.f32 %v1402, %v1445
    %v1448 = vadd.f32 %v1422, %v1445
    %v1449 = vadd.f32 %v1442, %v1445
    %v1450 = vmax.f32 %v1446, 0.0
    %v1451 = vmax.f32 %v1447, 0.0
    %v1452 = vmax.f32 %v1448, 0.0
    %v1453 = vmax.f32 %v1449, 0.0
    %v1458 = vrot.slane %v1451, 7
    %v1459 = vrot.slane %v1452, 6
    %v1460 = vrot.slane %v1453, 5
    %vm1461 = vcmask 1040384
    %v1462 = vsel %vm1461, %v1450, %v1458
    %vm1463 = vcmask 1042434
    %v1464 = vsel %vm1463, %v1459, %v1460
    %vm1465 = vcmask 1041408
    %v1466 = vsel %vm1465, %v1462, %v1464
    %v1468 = vlaneseq
    %vm1469 = vcmp.ge.s32.totalorder %v1468, 0
    %vm1470 = vcmp.lt.s32.totalorder %v1468, 512
    %vm1471 = vmand %vm1469, %vm1470
    %1472 = vst.msk [vmem:[#allocation3] sm:$0xf] %vm1471, %v1466
    // Predicated region
    $region30: #{rank_net_forward.1} parent=1 // pred_check
      _
    $region31: #{rank_net_forward.1} parent=1 // pred_check_branch
      %1474 = sbr.rel (0) target = $region33
    $region32: #{rank_net_forward.1} parent=1 // pred_region
      %1476 = vsyncadd [#allocation4], 48
      %s1478 = sshll.u32 [#allocation3], 4
      %s1479 = int_to_ptr.vmem [resolvable:$true] %s1478
      %s1480 = sshll.u32 %s7, 4
      %s1481 = int_to_ptr.hbm [resolvable:$true] %s1480
      %1483 = dma.vmem_to_hbm [thread:$0]  %s1479, 16, %s1481, [#allocation4]
    $region33: #{rank_net_forward.1} parent=1 // pred_fallthru
      _
    // Predicated region
    $region34: #{rank_net_forward.1} parent=1 // pred_check
      _
    $region35: #{rank_net_forward.1} parent=1 // pred_check_branch
      %1485 = sbr.rel (0) target = $region37
    $region36: #{rank_net_forward.1} parent=1 // pred_region
      %1487 = dma.done [#allocation4], 64
    $region37: #{rank_net_forward.1} parent=1 // pred_fallthru
      _
    %1488 = vsyncpa [#allocation4], 1

</llo_original>
